<compile_context>
chip_gen: v6e
topology: v6e:2x2x1
jax: 0.10.0
libtpu: 0.0.40
codegen_flags: <defaults>
</compile_context>

<pallas_src>
import jax
import jax.numpy as jnp
from jax.experimental import pallas as pl
from jax.experimental.pallas import tpu as pltpu

BATCH = 8           # graphs per pallas_call (8 * 32 = 256 output lanes = 2 vregs)
N_NODES = 16        # nodes per graph
IN_CH = 16          # in_channels
OUT_CH = 32         # out_channels (!= in_channels -> residual uses res_conv Linear)
N_EDGES = 24
BN_EPS = 1e-5


# ---------------------------------------------------------------------------
# Pallas kernel (per call / per grid step, all graphs of the block at once):
#   t    = A_b @ X_b                      (narrow-Cin aggregation, f32 acc)
#   pre  = [t | X] @ [W ; Wr]             (fused conv + residual, K = 2*Cin)
#   pack = lane-pack pre -> [N, B*Cout]   (relayout BEFORE BatchNorm)
#   out  = ReLU( (pack - mean) * gamma * rsqrt(var + eps) + beta )  per graph
# Biases omitted: cancelled by training-mode BN mean subtraction.
# ---------------------------------------------------------------------------
def gcn_layer_kernel(a_ref, x_ref, wc_ref, gb_ref, o_ref):
    batch, n, cin = x_ref.shape            # static
    cout = wc_ref.shape[1]                 # static

    x3 = x_ref[...]                                            # [B, N, Cin]

    # Reassociated aggregation: contract over nodes while the feature width is
    # still the narrow Cin (fewer MXU MACs than aggregating X@W).
    t3 = jnp.einsum('bij,bjc->bic', a_ref[...], x3,
                    preferred_element_type=jnp.float32)        # [B, N, Cin] f32

    # One fused weight matmul with K = 2*Cin: pre = [A@X | X] @ [W ; Wr].
    t2 = t3.astype(x3.dtype).reshape(batch * n, cin)
    x2 = x3.reshape(batch * n, cin)
    tx = jnp.concatenate([t2, x2], axis=1)                     # [B*N, 2*Cin]
    pre = jnp.dot(tx, wc_ref[...],
                  preferred_element_type=jnp.float32)          # [B*N, Cout] f32

    # Lane-pack relayout BEFORE BatchNorm: [B*N, Cout] -> [N, B*Cout], so the
    # BN/ReLU pass below runs once over the full lane-dense slab and the store
    # is a single unmasked vst.
    packed = jnp.concatenate(
        [pre[g * n:(g + 1) * n, :] for g in range(batch)], axis=1)  # [N, B*C]

    # Per-graph BatchNorm1d (training statistics over that graph's N nodes),
    # affine folded into one scale/shift, then ReLU.  Conv/residual biases are
    # omitted: constant per-channel shifts cancel under the mean subtraction.
    # TODO(synk): eval-mode BatchNorm (running stats) would need the biases
    # restored since they no longer cancel.
    mean = jnp.mean(packed, axis=0, keepdims=True)              # [1, B*C]
    centered = packed - mean
    var = jnp.mean(centered * centered, axis=0, keepdims=True)  # [1, B*C]
    scale = gb_ref[0:1, :] * jax.lax.rsqrt(var + BN_EPS)        # gamma / std
    o_ref[...] = jnp.maximum(centered * scale + gb_ref[1:2, :], 0.0)


def gcn_layer_pallas(a, x, w, wr, gamma, beta, *,
                     mxu_dtype=jnp.bfloat16, graphs_per_step=None):
    """a: [B, N, N] per-graph normalized adjacency; x: [B, N, Cin];
    w, wr: [Cin, Cout]; gamma, beta: [1, Cout].  Returns [B, N, Cout] f32."""
    batch, n, cin = x.shape
    cout = w.shape[1]

    # Fused conv + residual weights (stacked along K) and merged, lane-tiled BN
    # affine (row 0 = gamma, row 1 = beta) matching the packed [N, B*Cout] layout.
    wc = jnp.concatenate([w, wr], axis=0).astype(mxu_dtype)          # [2*Cin, Cout]
    gb = jnp.concatenate([jnp.tile(gamma.astype(jnp.float32), (1, batch)),
                          jnp.tile(beta.astype(jnp.float32), (1, batch))],
                         axis=0)                                     # [2, B*Cout] f32
    a_m = a.astype(mxu_dtype)
    x_m = x.astype(mxu_dtype)

    out_shape = jax.ShapeDtypeStruct((n, batch * cout), jnp.float32)

    if graphs_per_step is None or graphs_per_step >= batch:
        # Single gridless call: at toy sizes the kernel is launch/DMA bound and
        # per-step grid overhead (~0.35us) is not worth paying.
        vmem = pl.BlockSpec(memory_space=pltpu.MemorySpace.VMEM)
        packed = pl.pallas_call(
            gcn_layer_kernel,
            out_shape=out_shape,
            in_specs=[vmem, vmem, vmem, vmem],
            out_specs=vmem,
        )(a_m, x_m, wc, gb)
    else:
        # 1-D grid over graph groups; "parallel" lets v7x shard steps across its
        # two TensorCores.  Each step still stores a lane-dense [N, bg*Cout] slab.
        bg = graphs_per_step
        assert batch % bg == 0, "graphs_per_step must divide the batch"
        packed = pl.pallas_call(
            gcn_layer_kernel,
            out_shape=out_shape,
            grid=(batch // bg,),
            in_specs=[
                pl.BlockSpec((bg, n, n), lambda g: (g, 0, 0)),
                pl.BlockSpec((bg, n, cin), lambda g: (g, 0, 0)),
                pl.BlockSpec((2 * cin, cout), lambda g: (0, 0)),
                pl.BlockSpec((2, bg * cout), lambda g: (0, g)),
            ],
            out_specs=pl.BlockSpec((n, bg * cout), lambda g: (0, g)),
            compiler_params=pltpu.CompilerParams(
                dimension_semantics=("parallel",)),
        )(a_m, x_m, wc, gb)

    # TODO(synk): for non-toy N, additionally tile rows of each A_b with the
    # node-contraction as the LAST ("arbitrary") grid axis, a VMEM f32
    # accumulator with pl.when init/finalize, and tile sizes re-derived for
    # v7x's 64 MiB VMEM / 32 MiB default scoped limit.

    # Unpack the lane-packed [N, B*Cout] result back to [B, N, Cout].
    return packed.reshape(n, batch, cout).transpose(1, 0, 2)


# ---------------------------------------------------------------------------
# Glue: reproduce GCNLayer's edge preprocessing + GCNConv's gcn_norm as a dense
# per-graph normalized adjacency (static shapes; invalid edges handled by zero
# weights instead of dynamic filtering).
# ---------------------------------------------------------------------------
def build_normalized_adjacency(edge_index, num_nodes):
    src = edge_index[0]
    dst = edge_index[1]
    valid = (src >= 0) & (src < num_nodes) & (dst >= 0) & (dst < num_nodes)
    w = valid.astype(jnp.float32)

    # dense adjacency: A[target, source] accumulates edge weights
    src_c = jnp.clip(src, 0, num_nodes - 1)
    dst_c = jnp.clip(dst, 0, num_nodes - 1)
    A = jnp.zeros((num_nodes, num_nodes), jnp.float32)
    A = A.at[dst_c, src_c].add(w)

    # GCNLayer: degree over both endpoints -> self-loops for isolated nodes
    deg_both = jnp.zeros((num_nodes,), jnp.float32)
    deg_both = deg_both.at[src_c].add(w)
    deg_both = deg_both.at[dst_c].add(w)
    iso = (deg_both == 0).astype(jnp.float32)
    A = A + jnp.diag(iso)

    # GCNLayer fallback: if no valid edges at all, use pure self-loop graph
    A = jnp.where(jnp.sum(w) > 0, A, jnp.eye(num_nodes, dtype=jnp.float32))

    # GCNConv gcn_norm: add self-loops for every node, symmetric normalization
    A_hat = A + jnp.eye(num_nodes, dtype=jnp.float32)
    deg = jnp.sum(A_hat, axis=1)
    dinv = jnp.where(deg > 0, 1.0 / jnp.sqrt(deg), 0.0)
    return A_hat * dinv[:, None] * dinv[None, :]


def reference_forward(a_norm, x, w, b, wr, br, gamma, beta):
    # Reference keeps the biases and the unfused, un-reassociated formulation.
    out = a_norm @ (x @ w) + b
    out = out + (x @ wr + br)
    mean = jnp.mean(out, axis=0, keepdims=True)
    var = jnp.mean((out - mean) ** 2, axis=0, keepdims=True)
    out = (out - mean) / jnp.sqrt(var + BN_EPS) * gamma + beta
    return jnp.maximum(out, 0.0)


if __name__ == "__main__":
    key = jax.random.PRNGKey(0)
    kx, ke, kw, kb, kwr, kbr, kg, kbe = jax.random.split(key, 8)

    # Batch of graphs: node features [B, N, in_channels], edge_index [B, 2, E]
    # (some indices exceed N_NODES to exercise the valid-mask path).
    x = jax.random.normal(kx, (BATCH, N_NODES, IN_CH), jnp.float32)
    ek1, ek2 = jax.random.split(ke)
    src = jax.random.randint(ek1, (BATCH, N_EDGES), 0, N_NODES + 4, dtype=jnp.int32)
    dst = jax.random.randint(ek2, (BATCH, N_EDGES), 0, N_NODES + 4, dtype=jnp.int32)
    edge_index = jnp.stack([src, dst], axis=1)                    # [B, 2, E]

    # Deterministic module parameters (shared across the batch).
    w = jax.random.normal(kw, (IN_CH, OUT_CH), jnp.float32) * 0.1     # GCNConv weight
    b = jax.random.normal(kb, (1, OUT_CH), jnp.float32) * 0.1         # GCNConv bias (reference only)
    wr = jax.random.normal(kwr, (IN_CH, OUT_CH), jnp.float32) * 0.1   # res_conv weight
    br = jax.random.normal(kbr, (1, OUT_CH), jnp.float32) * 0.1       # res_conv bias (reference only)
    gamma = 1.0 + 0.05 * jax.random.normal(kg, (1, OUT_CH), jnp.float32)  # bn weight
    beta = 0.05 * jax.random.normal(kbe, (1, OUT_CH), jnp.float32)        # bn bias

    # Per-graph normalized adjacency kept as [B, N, N] (no block-diag assembly).
    a = jnp.stack([build_normalized_adjacency(edge_index[bi], N_NODES)
                   for bi in range(BATCH)], axis=0)

    # Per-graph reference WITH biases (the kernel drops them because
    # training-mode BatchNorm mean subtraction cancels them exactly).
    ref = jnp.stack([reference_forward(a[bi], x[bi], w, b, wr, br, gamma, beta)
                     for bi in range(BATCH)], axis=0)

    # 1) f32 MXU operands, gridless: strict check of structure / packing / BN.
    out_f32 = gcn_layer_pallas(a, x, w, wr, gamma, beta, mxu_dtype=jnp.float32)
    out_f32 = jax.block_until_ready(out_f32)
    assert out_f32.shape == (BATCH, N_NODES, OUT_CH)
    assert jnp.allclose(out_f32, ref, atol=1e-4, rtol=1e-4)

    # 2) bf16 MXU operands (recommended fast path), gridless: loose tolerance.
    out_bf16 = gcn_layer_pallas(a, x, w, wr, gamma, beta, mxu_dtype=jnp.bfloat16)
    out_bf16 = jax.block_until_ready(out_bf16)
    diff = jnp.abs(out_bf16 - ref)
    assert float(jnp.max(diff)) < 0.3 and float(jnp.mean(diff)) < 0.05

    # 3) bf16 + 1-D grid over graph groups (2 parallel steps -> both v7x TCs).
    out_grid = gcn_layer_pallas(a, x, w, wr, gamma, beta,
                                mxu_dtype=jnp.bfloat16, graphs_per_step=4)
    out_grid = jax.block_until_ready(out_grid)
    diff_g = jnp.abs(out_grid - ref)
    assert float(jnp.max(diff_g)) < 0.3 and float(jnp.mean(diff_g)) < 0.05

    print("KERNEL_OK")
</pallas_src>

<mosaic_0001>
module attributes {stable_mosaic.version = 11 : i64} {
  func.func @gcn_layer_kernel(%arg0: memref<8x16x16xf32, #tpu.memory_space<vmem>>, %arg1: memref<8x16x16xf32, #tpu.memory_space<vmem>>, %arg2: memref<32x32xf32, #tpu.memory_space<vmem>>, %arg3: memref<2x256xf32, #tpu.memory_space<vmem>>, %arg4: memref<16x256xf32, #tpu.memory_space<vmem>>) attributes {dimension_semantics = [], scalar_prefetch = 0 : i64, scratch_operands = 0 : i64, tpu.core_type = #tpu.core_type<tc>} {
    %c0 = arith.constant 0 : index
    %c0_0 = arith.constant 0 : index
    %c0_1 = arith.constant 0 : index
    %0 = vector.load %arg1[%c0, %c0_0, %c0_1] : memref<8x16x16xf32, #tpu.memory_space<vmem>>, vector<8x16x16xf32>
    %c0_2 = arith.constant 0 : index
    %c0_3 = arith.constant 0 : index
    %c0_4 = arith.constant 0 : index
    %1 = vector.load %arg0[%c0_2, %c0_3, %c0_4] : memref<8x16x16xf32, #tpu.memory_space<vmem>>, vector<8x16x16xf32>
    "tpu.trace_start"() <{level = 10 : i32, message = "bij,bjc->bic"}> : () -> ()
    %cst = arith.constant dense<0.000000e+00> : vector<8x16x16xf32>
    %2 = tpu.matmul %1, %0, %cst {dimension_numbers = #tpu.dot_dimension_numbers<[2], [1], [1], [2], [0, 0, 0, 1, 1, 2], [0], [0]>} : vector<8x16x16xf32>, vector<8x16x16xf32>, vector<8x16x16xf32> -> vector<8x16x16xf32>
    "tpu.trace_stop"() : () -> ()
    %3 = vector.shape_cast %2 : vector<8x16x16xf32> to vector<128x16xf32>
    %4 = vector.shape_cast %0 : vector<8x16x16xf32> to vector<128x16xf32>
    %5 = tpu.concatenate %3, %4 in 1 : vector<128x16xf32>, vector<128x16xf32> -> vector<128x32xf32>
    %c0_5 = arith.constant 0 : index
    %c0_6 = arith.constant 0 : index
    %6 = vector.load %arg2[%c0_5, %c0_6] : memref<32x32xf32, #tpu.memory_space<vmem>>, vector<32x32xf32>
    %cst_7 = arith.constant dense<0.000000e+00> : vector<128x32xf32>
    %7 = tpu.matmul %5, %6, %cst_7 {dimension_numbers = #tpu.dot_dimension_numbers<[1], [0], [0], [1], [0, 0, 1, 1], [], []>} : vector<128x32xf32>, vector<32x32xf32>, vector<128x32xf32> -> vector<128x32xf32>
    %8 = vector.extract_strided_slice %7 {offsets = [0, 0], sizes = [16, 32], strides = [1, 1]} : vector<128x32xf32> to vector<16x32xf32>
    %9 = vector.extract_strided_slice %7 {offsets = [16, 0], sizes = [16, 32], strides = [1, 1]} : vector<128x32xf32> to vector<16x32xf32>
    %10 = vector.extract_strided_slice %7 {offsets = [32, 0], sizes = [16, 32], strides = [1, 1]} : vector<128x32xf32> to vector<16x32xf32>
    %11 = vector.extract_strided_slice %7 {offsets = [48, 0], sizes = [16, 32], strides = [1, 1]} : vector<128x32xf32> to vector<16x32xf32>
    %12 = vector.extract_strided_slice %7 {offsets = [64, 0], sizes = [16, 32], strides = [1, 1]} : vector<128x32xf32> to vector<16x32xf32>
    %13 = vector.extract_strided_slice %7 {offsets = [80, 0], sizes = [16, 32], strides = [1, 1]} : vector<128x32xf32> to vector<16x32xf32>
    %14 = vector.extract_strided_slice %7 {offsets = [96, 0], sizes = [16, 32], strides = [1, 1]} : vector<128x32xf32> to vector<16x32xf32>
    %15 = vector.extract_strided_slice %7 {offsets = [112, 0], sizes = [16, 32], strides = [1, 1]} : vector<128x32xf32> to vector<16x32xf32>
    %16 = tpu.concatenate %8, %9, %10, %11, %12, %13, %14, %15 in 1 : vector<16x32xf32>, vector<16x32xf32>, vector<16x32xf32>, vector<16x32xf32>, vector<16x32xf32>, vector<16x32xf32>, vector<16x32xf32>, vector<16x32xf32> -> vector<16x256xf32>
    %cst_8 = arith.constant dense<0.000000e+00> : vector<256xf32>
    %17 = vector.multi_reduction <add>, %16, %cst_8 [0] : vector<16x256xf32> to vector<256xf32>
    %18 = vector.shape_cast %17 : vector<256xf32> to vector<1x256xf32>
    %cst_9 = arith.constant 1.600000e+01 : f32
    %19 = vector.broadcast %cst_9 : f32 to vector<1x256xf32>
    %20 = arith.divf %18, %19 : vector<1x256xf32>
    %21 = vector.broadcast %20 : vector<1x256xf32> to vector<16x256xf32>
    %22 = arith.subf %16, %21 : vector<16x256xf32>
    %23 = arith.mulf %22, %22 : vector<16x256xf32>
    %cst_10 = arith.constant dense<0.000000e+00> : vector<256xf32>
    %24 = vector.multi_reduction <add>, %23, %cst_10 [0] : vector<16x256xf32> to vector<256xf32>
    %25 = vector.shape_cast %24 : vector<256xf32> to vector<1x256xf32>
    %cst_11 = arith.constant 1.600000e+01 : f32
    %26 = vector.broadcast %cst_11 : f32 to vector<1x256xf32>
    %27 = arith.divf %25, %26 : vector<1x256xf32>
    %c0_12 = arith.constant 0 : index
    %c0_13 = arith.constant 0 : index
    %28 = vector.load %arg3[%c0_12, %c0_13] : memref<2x256xf32, #tpu.memory_space<vmem>>, vector<1x256xf32>
    %cst_14 = arith.constant 9.99999974E-6 : f32
    %29 = vector.broadcast %cst_14 : f32 to vector<1x256xf32>
    %30 = arith.addf %27, %29 : vector<1x256xf32>
    %31 = math.rsqrt %30 : vector<1x256xf32>
    %32 = arith.mulf %28, %31 : vector<1x256xf32>
    %33 = vector.broadcast %32 : vector<1x256xf32> to vector<16x256xf32>
    %34 = arith.mulf %22, %33 : vector<16x256xf32>
    %c1 = arith.constant 1 : index
    %c0_15 = arith.constant 0 : index
    %35 = vector.load %arg3[%c1, %c0_15] : memref<2x256xf32, #tpu.memory_space<vmem>>, vector<1x256xf32>
    %36 = vector.broadcast %35 : vector<1x256xf32> to vector<16x256xf32>
    %37 = arith.addf %34, %36 : vector<16x256xf32>
    %cst_16 = arith.constant 0.000000e+00 : f32
    %38 = vector.broadcast %cst_16 : f32 to vector<16x256xf32>
    %39 = arith.maximumf %37, %38 : vector<16x256xf32>
    %c0_17 = arith.constant 0 : index
    %c0_18 = arith.constant 0 : index
    %40 = vector.load %arg4[%c0_17, %c0_18] : memref<16x256xf32, #tpu.memory_space<vmem>>, vector<16x256xf32>
    tpu.vector_store %arg4[%c0_17, %c0_18], %39 {strides = array<i32>} : memref<16x256xf32, #tpu.memory_space<vmem>>, vector<16x256xf32>,
    return
  }
}

</mosaic_0001>

<llo_original>
// kernel: tpu_custom_call.1
$region0: #{tpu_custom_call.1}
  #allocation0 [shape = 'u32[]', space=smem, size = 0x4, offset = 0x4, fixed_abs, tag = 'smem constant byte address 0x4 - core index']
  #allocation1 [shape = 'u32[144,128]{1,0:T(1,128)}', space=vmem, size = 0x12000, scoped, tag = 'internal scratch']
  %s0 = inlined_call_operand.hbm [shape: f32[8,16,16], index: 0, kind: input, shape index: {}]
  %s1 = inlined_call_operand.hbm [shape: f32[8,16,16], index: 1, kind: input, shape index: {}]
  %s2 = inlined_call_operand.hbm [shape: f32[32,32], index: 2, kind: input, shape index: {}]
  %s3 = inlined_call_operand.vmem [shape: f32[2,256], index: 3, kind: input, shape index: {}]
  %s4 = inlined_call_operand.hbm [shape: f32[16,256], index: 4, kind: output, shape index: {}]
  %s5 = sld [smem:[#allocation0]]
  $region38: #{tpu_custom_call.1} parent=0
    _
  %s7 = ssub.s32 1, %s5
  %s8 = scalar_select 0, %s7, %s5
  $region1: #{tpu_custom_call.1} parent=0
    #allocation2 [shape = 'u8[65536]{0}', space=vmem, size = 0x10000, scoped, tag = 'input window, operand 0, single buffered']
    #allocation3 [shape = 's32[1]{0}', space=sflag, size = 0x4, scoped, tag = 'scoped memory for tpu_custom_call.1']
    #allocation4 [shape = 's32[1]{0}', space=sflag, size = 0x4, scoped, tag = 'scoped memory for tpu_custom_call.1']
    #allocation5 [shape = 'u8[65536]{0}', space=vmem, size = 0x10000, scoped, tag = 'input window, operand 1, single buffered']
    #allocation6 [shape = 's32[1]{0}', space=sflag, size = 0x4, scoped, tag = 'scoped memory for tpu_custom_call.1']
    #allocation7 [shape = 'u8[16384]{0}', space=vmem, size = 0x4000, scoped, tag = 'input window, operand 2, single buffered']
    #allocation8 [shape = 'u8[16384]{0}', space=vmem, size = 0x4000, scoped, tag = 'output window, operand 0, single buffered']
    %9 = vsyncpa [#allocation3], 0
    %10 = vsyncpa [#allocation6], 0
    %11 = vsyncpa [#allocation4], 0
    // Predicated region
    $region2: #{tpu_custom_call.1} parent=1 // pred_check
      _
    $region3: #{tpu_custom_call.1} parent=1 // pred_check_branch
      %13 = sbr.rel (0) target = $region5
    $region4: #{tpu_custom_call.1} parent=1 // pred_region
      %s15 = ssub.s32 2048, 2048
      %16 = vsyncadd [#allocation3], %s15
      %s17 = sshll.u32 [#allocation2], 4
      %s18 = int_to_ptr.vmem [resolvable:$true] %s17
      %23 = dma.hbm_to_vmem [thread:$0]  %s0, 2048, %s18, [#allocation3], 128, 128, 8
    $region5: #{tpu_custom_call.1} parent=1 // pred_fallthru
      _
    // Predicated region
    $region6: #{tpu_custom_call.1} parent=1 // pred_check
      _
    $region7: #{tpu_custom_call.1} parent=1 // pred_check_branch
      %25 = sbr.rel (0) target = $region9
    $region8: #{tpu_custom_call.1} parent=1 // pred_region
      %s27 = ssub.s32 2048, 2048
      %28 = vsyncadd [#allocation6], %s27
      %s29 = sshll.u32 [#allocation5], 4
      %s30 = int_to_ptr.vmem [resolvable:$true] %s29
      %35 = dma.hbm_to_vmem [thread:$0]  %s1, 2048, %s30, [#allocation6], 128, 128, 8
    $region9: #{tpu_custom_call.1} parent=1 // pred_fallthru
      _
    // Predicated region
    $region10: #{tpu_custom_call.1} parent=1 // pred_check
      _
    $region11: #{tpu_custom_call.1} parent=1 // pred_check_branch
      %37 = sbr.rel (0) target = $region13
    $region12: #{tpu_custom_call.1} parent=1 // pred_region
      %s39 = ssub.s32 512, 512
      %40 = vsyncadd [#allocation6], %s39
      %s41 = sshll.u32 [#allocation7], 4
      %s42 = int_to_ptr.vmem [resolvable:$true] %s41
      %47 = dma.hbm_to_vmem [thread:$0]  %s2, 512, %s42, [#allocation6], 128, 128, 8
    $region13: #{tpu_custom_call.1} parent=1 // pred_fallthru
      _
    // Predicated region
    $region14: #{tpu_custom_call.1} parent=1 // pred_check
      _
    $region15: #{tpu_custom_call.1} parent=1 // pred_check_branch
      %49 = sbr.rel (0) target = $region17
    $region16: #{tpu_custom_call.1} parent=1 // pred_region
      _
    $region17: #{tpu_custom_call.1} parent=1 // pred_fallthru
      _
    // Predicated region
    $region18: #{tpu_custom_call.1} parent=1 // pred_check
      _
    $region19: #{tpu_custom_call.1} parent=1 // pred_check_branch
      %51 = sbr.rel (0) target = $region21
    $region20: #{tpu_custom_call.1} parent=1 // pred_region
      %52 = dma.done [#allocation3], 2048
    $region21: #{tpu_custom_call.1} parent=1 // pred_fallthru
      _
    // Predicated region
    $region22: #{tpu_custom_call.1} parent=1 // pred_check
      _
    $region23: #{tpu_custom_call.1} parent=1 // pred_check_branch
      %54 = sbr.rel (0) target = $region25
    $region24: #{tpu_custom_call.1} parent=1 // pred_region
      %55 = dma.done [#allocation6], 2048
    $region25: #{tpu_custom_call.1} parent=1 // pred_fallthru
      _
    // Predicated region
    $region26: #{tpu_custom_call.1} parent=1 // pred_check
      _
    $region27: #{tpu_custom_call.1} parent=1 // pred_check_branch
      %57 = sbr.rel (0) target = $region29
    $region28: #{tpu_custom_call.1} parent=1 // pred_region
      %58 = dma.done [#allocation6], 512
    $region29: #{tpu_custom_call.1} parent=1 // pred_fallthru
      _
    %v59 = vld [vmem:[#allocation5] sm:$0xff]
    %v60 = vld [vmem:[#allocation5 + $0x8] sm:$0xff]
    %v61 = vld [vmem:[#allocation5 + $0x10] sm:$0xff]
    %v62 = vld [vmem:[#allocation5 + $0x18] sm:$0xff]
    %v63 = vld [vmem:[#allocation5 + $0x20] sm:$0xff]
    %v64 = vld [vmem:[#allocation5 + $0x28] sm:$0xff]
    %v65 = vld [vmem:[#allocation5 + $0x30] sm:$0xff]
    %v66 = vld [vmem:[#allocation5 + $0x38] sm:$0xff]
    %v67 = vld [vmem:[#allocation5 + $0x40] sm:$0xff]
    %v68 = vld [vmem:[#allocation5 + $0x48] sm:$0xff]
    %v69 = vld [vmem:[#allocation5 + $0x50] sm:$0xff]
    %v70 = vld [vmem:[#allocation5 + $0x58] sm:$0xff]
    %v71 = vld [vmem:[#allocation5 + $0x60] sm:$0xff]
    %v72 = vld [vmem:[#allocation5 + $0x68] sm:$0xff]
    %v73 = vld [vmem:[#allocation5 + $0x70] sm:$0xff]
    %v74 = vld [vmem:[#allocation5 + $0x78] sm:$0xff]
    %v75 = vld [vmem:[#allocation2] sm:$0xff]
    %v76 = vld [vmem:[#allocation2 + $0x8] sm:$0xff]
    %v77 = vld [vmem:[#allocation2 + $0x10] sm:$0xff]
    %v78 = vld [vmem:[#allocation2 + $0x18] sm:$0xff]
    %v79 = vld [vmem:[#allocation2 + $0x20] sm:$0xff]
    %v80 = vld [vmem:[#allocation2 + $0x28] sm:$0xff]
    %v81 = vld [vmem:[#allocation2 + $0x30] sm:$0xff]
    %v82 = vld [vmem:[#allocation2 + $0x38] sm:$0xff]
    %v83 = vld [vmem:[#allocation2 + $0x40] sm:$0xff]
    %v84 = vld [vmem:[#allocation2 + $0x48] sm:$0xff]
    %v85 = vld [vmem:[#allocation2 + $0x50] sm:$0xff]
    %v86 = vld [vmem:[#allocation2 + $0x58] sm:$0xff]
    %v87 = vld [vmem:[#allocation2 + $0x60] sm:$0xff]
    %v88 = vld [vmem:[#allocation2 + $0x68] sm:$0xff]
    %v89 = vld [vmem:[#allocation2 + $0x70] sm:$0xff]
    %v90 = vld [vmem:[#allocation2 + $0x78] sm:$0xff]
    %vm91 = vcmask 130048
    %v93 = vsel %vm91, %v75, 0
    %v96 = vsel %vm91, %v76, 0
    %98 = vmatprep.subr.mxu0 0.0
    %99 = vmatpush1.msra.mxu0 0.0
    %100 = vmatprep.subr.mxu0 0.0
    %101 = vmatpush1.msra.mxu0 0.0
    %102 = vmatprep.subr.mxu0 0.0
    %103 = vmatpush1.msra.mxu0 0.0
    %104 = vmatprep.subr.mxu0 0.0
    %105 = vmatpush1.msra.mxu0 0.0
    %106 = vmatprep.subr.mxu0 0.0
    %107 = vmatpush1.msra.mxu0 0.0
    %108 = vmatprep.subr.mxu0 0.0
    %109 = vmatpush1.msra.mxu0 0.0
    %110 = vmatprep.subr.mxu0 0.0
    %111 = vmatpush1.msra.mxu0 0.0
    %112 = vmatprep.subr.mxu0 0.0
    %113 = vmatpush1.msra.mxu0 0.0
    %114 = vmatprep.subr.mxu0 0.0
    %115 = vmatpush1.msra.mxu0 0.0
    %116 = vmatprep.subr.mxu0 0.0
    %117 = vmatpush1.msra.mxu0 0.0
    %118 = vmatprep.subr.mxu0 0.0
    %119 = vmatpush1.msra.mxu0 0.0
    %120 = vmatprep.subr.mxu0 0.0
    %121 = vmatpush1.msra.mxu0 0.0
    %122 = vmatprep.subr.mxu0 0.0
    %123 = vmatpush1.msra.mxu0 0.0
    %124 = vmatprep.subr.mxu0 0.0
    %125 = vmatpush1.msra.mxu0 0.0
    %126 = vmatprep.subr.mxu0 0.0
    %127 = vmatpush1.msra.mxu0 %v60
    %128 = vmatprep.subr.mxu0 0.0
    %129 = vmatpush1.msra.mxu0 %v59
    %130 = vmatprep.subr.mxu0 0.0
    %131 = vmatpush2.msra.mxu0 0.0
    %132 = vmatprep.subr.mxu0 0.0
    %133 = vmatpush2.msra.mxu0 0.0
    %134 = vmatprep.subr.mxu0 0.0
    %135 = vmatpush2.msra.mxu0 0.0
    %136 = vmatprep.subr.mxu0 0.0
    %137 = vmatpush2.msra.mxu0 0.0
    %138 = vmatprep.subr.mxu0 0.0
    %139 = vmatpush2.msra.mxu0 0.0
    %140 = vmatprep.subr.mxu0 0.0
    %141 = vmatpush2.msra.mxu0 0.0
    %142 = vmatprep.subr.mxu0 0.0
    %143 = vmatpush2.msra.mxu0 0.0
    %144 = vmatprep.subr.mxu0 0.0
    %145 = vmatpush2.msra.mxu0 0.0
    %146 = vmatprep.subr.mxu0 0.0
    %147 = vmatpush2.msra.mxu0 0.0
    %148 = vmatprep.subr.mxu0 0.0
    %149 = vmatpush2.msra.mxu0 0.0
    %150 = vmatprep.subr.mxu0 0.0
    %151 = vmatpush2.msra.mxu0 0.0
    %152 = vmatprep.subr.mxu0 0.0
    %153 = vmatpush2.msra.mxu0 0.0
    %154 = vmatprep.subr.mxu0 0.0
    %155 = vmatpush2.msra.mxu0 0.0
    %156 = vmatprep.subr.mxu0 0.0
    %157 = vmatpush2.msra.mxu0 0.0
    %158 = vmatprep.subr.mxu0 0.0
    %159 = vmatpush2.msra.mxu0 0.0
    %160 = vmatprep.subr.mxu0 0.0
    %161 = vmatpush2.msra.mxu0 0.0
    %162 = vmatprep.mubr.f32.mxu0 0.0
    %163 = vmatmul.mubr.f32.gmra.mxu0 %v93
    %v164 = vpop.f32.mrf.mxu0
    %v165 = vadd.f32 0.0, %v164
    %v166 = vpop.f32.mrf.mxu0
    %167 = vmatprep.mubr.f32.mxu0 0.0
    %168 = vmatmul.mubr.f32.gmra.mxu0 %v96
    %v169 = vpop.f32.mrf.mxu0
    %v170 = vadd.f32 0.0, %v169
    %v171 = vpop.f32.mrf.mxu0
    %172 = vdwg.mxu0
    %v174 = vsel %vm91, %v77, 0
    %v177 = vsel %vm91, %v78, 0
    %179 = vmatprep.subr.mxu0 0.0
    %180 = vmatpush1.msra.mxu0 0.0
    %181 = vmatprep.subr.mxu0 0.0
    %182 = vmatpush1.msra.mxu0 0.0
    %183 = vmatprep.subr.mxu0 0.0
    %184 = vmatpush1.msra.mxu0 0.0
    %185 = vmatprep.subr.mxu0 0.0
    %186 = vmatpush1.msra.mxu0 0.0
    %187 = vmatprep.subr.mxu0 0.0
    %188 = vmatpush1.msra.mxu0 0.0
    %189 = vmatprep.subr.mxu0 0.0
    %190 = vmatpush1.msra.mxu0 0.0
    %191 = vmatprep.subr.mxu0 0.0
    %192 = vmatpush1.msra.mxu0 0.0
    %193 = vmatprep.subr.mxu0 0.0
    %194 = vmatpush1.msra.mxu0 0.0
    %195 = vmatprep.subr.mxu0 0.0
    %196 = vmatpush1.msra.mxu0 0.0
    %197 = vmatprep.subr.mxu0 0.0
    %198 = vmatpush1.msra.mxu0 0.0
    %199 = vmatprep.subr.mxu0 0.0
    %200 = vmatpush1.msra.mxu0 0.0
    %201 = vmatprep.subr.mxu0 0.0
    %202 = vmatpush1.msra.mxu0 0.0
    %203 = vmatprep.subr.mxu0 0.0
    %204 = vmatpush1.msra.mxu0 0.0
    %205 = vmatprep.subr.mxu0 0.0
    %206 = vmatpush1.msra.mxu0 0.0
    %207 = vmatprep.subr.mxu0 0.0
    %208 = vmatpush1.msra.mxu0 %v62
    %209 = vmatprep.subr.mxu0 0.0
    %210 = vmatpush1.msra.mxu0 %v61
    %211 = vmatprep.subr.mxu0 0.0
    %212 = vmatpush2.msra.mxu0 0.0
    %213 = vmatprep.subr.mxu0 0.0
    %214 = vmatpush2.msra.mxu0 0.0
    %215 = vmatprep.subr.mxu0 0.0
    %216 = vmatpush2.msra.mxu0 0.0
    %217 = vmatprep.subr.mxu0 0.0
    %218 = vmatpush2.msra.mxu0 0.0
    %219 = vmatprep.subr.mxu0 0.0
    %220 = vmatpush2.msra.mxu0 0.0
    %221 = vmatprep.subr.mxu0 0.0
    %222 = vmatpush2.msra.mxu0 0.0
    %223 = vmatprep.subr.mxu0 0.0
    %224 = vmatpush2.msra.mxu0 0.0
    %225 = vmatprep.subr.mxu0 0.0
    %226 = vmatpush2.msra.mxu0 0.0
    %227 = vmatprep.subr.mxu0 0.0
    %228 = vmatpush2.msra.mxu0 0.0
    %229 = vmatprep.subr.mxu0 0.0
    %230 = vmatpush2.msra.mxu0 0.0
    %231 = vmatprep.subr.mxu0 0.0
    %232 = vmatpush2.msra.mxu0 0.0
    %233 = vmatprep.subr.mxu0 0.0
    %234 = vmatpush2.msra.mxu0 0.0
    %235 = vmatprep.subr.mxu0 0.0
    %236 = vmatpush2.msra.mxu0 0.0
    %237 = vmatprep.subr.mxu0 0.0
    %238 = vmatpush2.msra.mxu0 0.0
    %239 = vmatprep.subr.mxu0 0.0
    %240 = vmatpush2.msra.mxu0 0.0
    %241 = vmatprep.subr.mxu0 0.0
    %242 = vmatpush2.msra.mxu0 0.0
    %243 = vmatprep.mubr.f32.mxu0 0.0
    %244 = vmatmul.mubr.f32.gmra.mxu0 %v174
    %v245 = vpop.f32.mrf.mxu0
    %v246 = vadd.f32 0.0, %v245
    %v247 = vpop.f32.mrf.mxu0
    %248 = vmatprep.mubr.f32.mxu0 0.0
    %249 = vmatmul.mubr.f32.gmra.mxu0 %v177
    %v250 = vpop.f32.mrf.mxu0
    %v251 = vadd.f32 0.0, %v250
    %v252 = vpop.f32.mrf.mxu0
    %253 = vdwg.mxu0
    %v255 = vsel %vm91, %v79, 0
    %v258 = vsel %vm91, %v80, 0
    %260 = vmatprep.subr.mxu0 0.0
    %261 = vmatpush1.msra.mxu0 0.0
    %262 = vmatprep.subr.mxu0 0.0
    %263 = vmatpush1.msra.mxu0 0.0
    %264 = vmatprep.subr.mxu0 0.0
    %265 = vmatpush1.msra.mxu0 0.0
    %266 = vmatprep.subr.mxu0 0.0
    %267 = vmatpush1.msra.mxu0 0.0
    %268 = vmatprep.subr.mxu0 0.0
    %269 = vmatpush1.msra.mxu0 0.0
    %270 = vmatprep.subr.mxu0 0.0
    %271 = vmatpush1.msra.mxu0 0.0
    %272 = vmatprep.subr.mxu0 0.0
    %273 = vmatpush1.msra.mxu0 0.0
    %274 = vmatprep.subr.mxu0 0.0
    %275 = vmatpush1.msra.mxu0 0.0
    %276 = vmatprep.subr.mxu0 0.0
    %277 = vmatpush1.msra.mxu0 0.0
    %278 = vmatprep.subr.mxu0 0.0
    %279 = vmatpush1.msra.mxu0 0.0
    %280 = vmatprep.subr.mxu0 0.0
    %281 = vmatpush1.msra.mxu0 0.0
    %282 = vmatprep.subr.mxu0 0.0
    %283 = vmatpush1.msra.mxu0 0.0
    %284 = vmatprep.subr.mxu0 0.0
    %285 = vmatpush1.msra.mxu0 0.0
    %286 = vmatprep.subr.mxu0 0.0
    %287 = vmatpush1.msra.mxu0 0.0
    %288 = vmatprep.subr.mxu0 0.0
    %289 = vmatpush1.msra.mxu0 %v64
    %290 = vmatprep.subr.mxu0 0.0
    %291 = vmatpush1.msra.mxu0 %v63
    %292 = vmatprep.subr.mxu0 0.0
    %293 = vmatpush2.msra.mxu0 0.0
    %294 = vmatprep.subr.mxu0 0.0
    %295 = vmatpush2.msra.mxu0 0.0
    %296 = vmatprep.subr.mxu0 0.0
    %297 = vmatpush2.msra.mxu0 0.0
    %298 = vmatprep.subr.mxu0 0.0
    %299 = vmatpush2.msra.mxu0 0.0
    %300 = vmatprep.subr.mxu0 0.0
    %301 = vmatpush2.msra.mxu0 0.0
    %302 = vmatprep.subr.mxu0 0.0
    %303 = vmatpush2.msra.mxu0 0.0
    %304 = vmatprep.subr.mxu0 0.0
    %305 = vmatpush2.msra.mxu0 0.0
    %306 = vmatprep.subr.mxu0 0.0
    %307 = vmatpush2.msra.mxu0 0.0
    %308 = vmatprep.subr.mxu0 0.0
    %309 = vmatpush2.msra.mxu0 0.0
    %310 = vmatprep.subr.mxu0 0.0
    %311 = vmatpush2.msra.mxu0 0.0
    %312 = vmatprep.subr.mxu0 0.0
    %313 = vmatpush2.msra.mxu0 0.0
    %314 = vmatprep.subr.mxu0 0.0
    %315 = vmatpush2.msra.mxu0 0.0
    %316 = vmatprep.subr.mxu0 0.0
    %317 = vmatpush2.msra.mxu0 0.0
    %318 = vmatprep.subr.mxu0 0.0
    %319 = vmatpush2.msra.mxu0 0.0
    %320 = vmatprep.subr.mxu0 0.0
    %321 = vmatpush2.msra.mxu0 0.0
    %322 = vmatprep.subr.mxu0 0.0
    %323 = vmatpush2.msra.mxu0 0.0
    %324 = vmatprep.mubr.f32.mxu0 0.0
    %325 = vmatmul.mubr.f32.gmra.mxu0 %v255
    %v326 = vpop.f32.mrf.mxu0
    %v327 = vadd.f32 0.0, %v326
    %v328 = vpop.f32.mrf.mxu0
    %329 = vmatprep.mubr.f32.mxu0 0.0
    %330 = vmatmul.mubr.f32.gmra.mxu0 %v258
    %v331 = vpop.f32.mrf.mxu0
    %v332 = vadd.f32 0.0, %v331
    %v333 = vpop.f32.mrf.mxu0
    %334 = vdwg.mxu0
    %v336 = vsel %vm91, %v81, 0
    %v339 = vsel %vm91, %v82, 0
    %341 = vmatprep.subr.mxu0 0.0
    %342 = vmatpush1.msra.mxu0 0.0
    %343 = vmatprep.subr.mxu0 0.0
    %344 = vmatpush1.msra.mxu0 0.0
    %345 = vmatprep.subr.mxu0 0.0
    %346 = vmatpush1.msra.mxu0 0.0
    %347 = vmatprep.subr.mxu0 0.0
    %348 = vmatpush1.msra.mxu0 0.0
    %349 = vmatprep.subr.mxu0 0.0
    %350 = vmatpush1.msra.mxu0 0.0
    %351 = vmatprep.subr.mxu0 0.0
    %352 = vmatpush1.msra.mxu0 0.0
    %353 = vmatprep.subr.mxu0 0.0
    %354 = vmatpush1.msra.mxu0 0.0
    %355 = vmatprep.subr.mxu0 0.0
    %356 = vmatpush1.msra.mxu0 0.0
    %357 = vmatprep.subr.mxu0 0.0
    %358 = vmatpush1.msra.mxu0 0.0
    %359 = vmatprep.subr.mxu0 0.0
    %360 = vmatpush1.msra.mxu0 0.0
    %361 = vmatprep.subr.mxu0 0.0
    %362 = vmatpush1.msra.mxu0 0.0
    %363 = vmatprep.subr.mxu0 0.0
    %364 = vmatpush1.msra.mxu0 0.0
    %365 = vmatprep.subr.mxu0 0.0
    %366 = vmatpush1.msra.mxu0 0.0
    %367 = vmatprep.subr.mxu0 0.0
    %368 = vmatpush1.msra.mxu0 0.0
    %369 = vmatprep.subr.mxu0 0.0
    %370 = vmatpush1.msra.mxu0 %v66
    %371 = vmatprep.subr.mxu0 0.0
    %372 = vmatpush1.msra.mxu0 %v65
    %373 = vmatprep.subr.mxu0 0.0
    %374 = vmatpush2.msra.mxu0 0.0
    %375 = vmatprep.subr.mxu0 0.0
    %376 = vmatpush2.msra.mxu0 0.0
    %377 = vmatprep.subr.mxu0 0.0
    %378 = vmatpush2.msra.mxu0 0.0
    %379 = vmatprep.subr.mxu0 0.0
    %380 = vmatpush2.msra.mxu0 0.0
    %381 = vmatprep.subr.mxu0 0.0
    %382 = vmatpush2.msra.mxu0 0.0
    %383 = vmatprep.subr.mxu0 0.0
    %384 = vmatpush2.msra.mxu0 0.0
    %385 = vmatprep.subr.mxu0 0.0
    %386 = vmatpush2.msra.mxu0 0.0
    %387 = vmatprep.subr.mxu0 0.0
    %388 = vmatpush2.msra.mxu0 0.0
    %389 = vmatprep.subr.mxu0 0.0
    %390 = vmatpush2.msra.mxu0 0.0
    %391 = vmatprep.subr.mxu0 0.0
    %392 = vmatpush2.msra.mxu0 0.0
    %393 = vmatprep.subr.mxu0 0.0
    %394 = vmatpush2.msra.mxu0 0.0
    %395 = vmatprep.subr.mxu0 0.0
    %396 = vmatpush2.msra.mxu0 0.0
    %397 = vmatprep.subr.mxu0 0.0
    %398 = vmatpush2.msra.mxu0 0.0
    %399 = vmatprep.subr.mxu0 0.0
    %400 = vmatpush2.msra.mxu0 0.0
    %401 = vmatprep.subr.mxu0 0.0
    %402 = vmatpush2.msra.mxu0 0.0
    %403 = vmatprep.subr.mxu0 0.0
    %404 = vmatpush2.msra.mxu0 0.0
    %405 = vmatprep.mubr.f32.mxu0 0.0
    %406 = vmatmul.mubr.f32.gmra.mxu0 %v336
    %v407 = vpop.f32.mrf.mxu0
    %v408 = vadd.f32 0.0, %v407
    %v409 = vpop.f32.mrf.mxu0
    %410 = vmatprep.mubr.f32.mxu0 0.0
    %411 = vmatmul.mubr.f32.gmra.mxu0 %v339
    %v412 = vpop.f32.mrf.mxu0
    %v413 = vadd.f32 0.0, %v412
    %v414 = vpop.f32.mrf.mxu0
    %415 = vdwg.mxu0
    %v417 = vsel %vm91, %v83, 0
    %v420 = vsel %vm91, %v84, 0
    %422 = vmatprep.subr.mxu0 0.0
    %423 = vmatpush1.msra.mxu0 0.0
    %424 = vmatprep.subr.mxu0 0.0
    %425 = vmatpush1.msra.mxu0 0.0
    %426 = vmatprep.subr.mxu0 0.0
    %427 = vmatpush1.msra.mxu0 0.0
    %428 = vmatprep.subr.mxu0 0.0
    %429 = vmatpush1.msra.mxu0 0.0
    %430 = vmatprep.subr.mxu0 0.0
    %431 = vmatpush1.msra.mxu0 0.0
    %432 = vmatprep.subr.mxu0 0.0
    %433 = vmatpush1.msra.mxu0 0.0
    %434 = vmatprep.subr.mxu0 0.0
    %435 = vmatpush1.msra.mxu0 0.0
    %436 = vmatprep.subr.mxu0 0.0
    %437 = vmatpush1.msra.mxu0 0.0
    %438 = vmatprep.subr.mxu0 0.0
    %439 = vmatpush1.msra.mxu0 0.0
    %440 = vmatprep.subr.mxu0 0.0
    %441 = vmatpush1.msra.mxu0 0.0
    %442 = vmatprep.subr.mxu0 0.0
    %443 = vmatpush1.msra.mxu0 0.0
    %444 = vmatprep.subr.mxu0 0.0
    %445 = vmatpush1.msra.mxu0 0.0
    %446 = vmatprep.subr.mxu0 0.0
    %447 = vmatpush1.msra.mxu0 0.0
    %448 = vmatprep.subr.mxu0 0.0
    %449 = vmatpush1.msra.mxu0 0.0
    %450 = vmatprep.subr.mxu0 0.0
    %451 = vmatpush1.msra.mxu0 %v68
    %452 = vmatprep.subr.mxu0 0.0
    %453 = vmatpush1.msra.mxu0 %v67
    %454 = vmatprep.subr.mxu0 0.0
    %455 = vmatpush2.msra.mxu0 0.0
    %456 = vmatprep.subr.mxu0 0.0
    %457 = vmatpush2.msra.mxu0 0.0
    %458 = vmatprep.subr.mxu0 0.0
    %459 = vmatpush2.msra.mxu0 0.0
    %460 = vmatprep.subr.mxu0 0.0
    %461 = vmatpush2.msra.mxu0 0.0
    %462 = vmatprep.subr.mxu0 0.0
    %463 = vmatpush2.msra.mxu0 0.0
    %464 = vmatprep.subr.mxu0 0.0
    %465 = vmatpush2.msra.mxu0 0.0
    %466 = vmatprep.subr.mxu0 0.0
    %467 = vmatpush2.msra.mxu0 0.0
    %468 = vmatprep.subr.mxu0 0.0
    %469 = vmatpush2.msra.mxu0 0.0
    %470 = vmatprep.subr.mxu0 0.0
    %471 = vmatpush2.msra.mxu0 0.0
    %472 = vmatprep.subr.mxu0 0.0
    %473 = vmatpush2.msra.mxu0 0.0
    %474 = vmatprep.subr.mxu0 0.0
    %475 = vmatpush2.msra.mxu0 0.0
    %476 = vmatprep.subr.mxu0 0.0
    %477 = vmatpush2.msra.mxu0 0.0
    %478 = vmatprep.subr.mxu0 0.0
    %479 = vmatpush2.msra.mxu0 0.0
    %480 = vmatprep.subr.mxu0 0.0
    %481 = vmatpush2.msra.mxu0 0.0
    %482 = vmatprep.subr.mxu0 0.0
    %483 = vmatpush2.msra.mxu0 0.0
    %484 = vmatprep.subr.mxu0 0.0
    %485 = vmatpush2.msra.mxu0 0.0
    %486 = vmatprep.mubr.f32.mxu0 0.0
    %487 = vmatmul.mubr.f32.gmra.mxu0 %v417
    %v488 = vpop.f32.mrf.mxu0
    %v489 = vadd.f32 0.0, %v488
    %v490 = vpop.f32.mrf.mxu0
    %491 = vmatprep.mubr.f32.mxu0 0.0
    %492 = vmatmul.mubr.f32.gmra.mxu0 %v420
    %v493 = vpop.f32.mrf.mxu0
    %v494 = vadd.f32 0.0, %v493
    %v495 = vpop.f32.mrf.mxu0
    %496 = vdwg.mxu0
    %v498 = vsel %vm91, %v85, 0
    %v501 = vsel %vm91, %v86, 0
    %503 = vmatprep.subr.mxu0 0.0
    %504 = vmatpush1.msra.mxu0 0.0
    %505 = vmatprep.subr.mxu0 0.0
    %506 = vmatpush1.msra.mxu0 0.0
    %507 = vmatprep.subr.mxu0 0.0
    %508 = vmatpush1.msra.mxu0 0.0
    %509 = vmatprep.subr.mxu0 0.0
    %510 = vmatpush1.msra.mxu0 0.0
    %511 = vmatprep.subr.mxu0 0.0
    %512 = vmatpush1.msra.mxu0 0.0
    %513 = vmatprep.subr.mxu0 0.0
    %514 = vmatpush1.msra.mxu0 0.0
    %515 = vmatprep.subr.mxu0 0.0
    %516 = vmatpush1.msra.mxu0 0.0
    %517 = vmatprep.subr.mxu0 0.0
    %518 = vmatpush1.msra.mxu0 0.0
    %519 = vmatprep.subr.mxu0 0.0
    %520 = vmatpush1.msra.mxu0 0.0
    %521 = vmatprep.subr.mxu0 0.0
    %522 = vmatpush1.msra.mxu0 0.0
    %523 = vmatprep.subr.mxu0 0.0
    %524 = vmatpush1.msra.mxu0 0.0
    %525 = vmatprep.subr.mxu0 0.0
    %526 = vmatpush1.msra.mxu0 0.0
    %527 = vmatprep.subr.mxu0 0.0
    %528 = vmatpush1.msra.mxu0 0.0
    %529 = vmatprep.subr.mxu0 0.0
    %530 = vmatpush1.msra.mxu0 0.0
    %531 = vmatprep.subr.mxu0 0.0
    %532 = vmatpush1.msra.mxu0 %v70
    %533 = vmatprep.subr.mxu0 0.0
    %534 = vmatpush1.msra.mxu0 %v69
    %535 = vmatprep.subr.mxu0 0.0
    %536 = vmatpush2.msra.mxu0 0.0
    %537 = vmatprep.subr.mxu0 0.0
    %538 = vmatpush2.msra.mxu0 0.0
    %539 = vmatprep.subr.mxu0 0.0
    %540 = vmatpush2.msra.mxu0 0.0
    %541 = vmatprep.subr.mxu0 0.0
    %542 = vmatpush2.msra.mxu0 0.0
    %543 = vmatprep.subr.mxu0 0.0
    %544 = vmatpush2.msra.mxu0 0.0
    %545 = vmatprep.subr.mxu0 0.0
    %546 = vmatpush2.msra.mxu0 0.0
    %547 = vmatprep.subr.mxu0 0.0
    %548 = vmatpush2.msra.mxu0 0.0
    %549 = vmatprep.subr.mxu0 0.0
    %550 = vmatpush2.msra.mxu0 0.0
    %551 = vmatprep.subr.mxu0 0.0
    %552 = vmatpush2.msra.mxu0 0.0
    %553 = vmatprep.subr.mxu0 0.0
    %554 = vmatpush2.msra.mxu0 0.0
    %555 = vmatprep.subr.mxu0 0.0
    %556 = vmatpush2.msra.mxu0 0.0
    %557 = vmatprep.subr.mxu0 0.0
    %558 = vmatpush2.msra.mxu0 0.0
    %559 = vmatprep.subr.mxu0 0.0
    %560 = vmatpush2.msra.mxu0 0.0
    %561 = vmatprep.subr.mxu0 0.0
    %562 = vmatpush2.msra.mxu0 0.0
    %563 = vmatprep.subr.mxu0 0.0
    %564 = vmatpush2.msra.mxu0 0.0
    %565 = vmatprep.subr.mxu0 0.0
    %566 = vmatpush2.msra.mxu0 0.0
    %567 = vmatprep.mubr.f32.mxu0 0.0
    %568 = vmatmul.mubr.f32.gmra.mxu0 %v498
    %v569 = vpop.f32.mrf.mxu0
    %v570 = vadd.f32 0.0, %v569
    %v571 = vpop.f32.mrf.mxu0
    %572 = vmatprep.mubr.f32.mxu0 0.0
    %573 = vmatmul.mubr.f32.gmra.mxu0 %v501
    %v574 = vpop.f32.mrf.mxu0
    %v575 = vadd.f32 0.0, %v574
    %v576 = vpop.f32.mrf.mxu0
    %577 = vdwg.mxu0
    %v579 = vsel %vm91, %v87, 0
    %v582 = vsel %vm91, %v88, 0
    %584 = vmatprep.subr.mxu0 0.0
    %585 = vmatpush1.msra.mxu0 0.0
    %586 = vmatprep.subr.mxu0 0.0
    %587 = vmatpush1.msra.mxu0 0.0
    %588 = vmatprep.subr.mxu0 0.0
    %589 = vmatpush1.msra.mxu0 0.0
    %590 = vmatprep.subr.mxu0 0.0
    %591 = vmatpush1.msra.mxu0 0.0
    %592 = vmatprep.subr.mxu0 0.0
    %593 = vmatpush1.msra.mxu0 0.0
    %594 = vmatprep.subr.mxu0 0.0
    %595 = vmatpush1.msra.mxu0 0.0
    %596 = vmatprep.subr.mxu0 0.0
    %597 = vmatpush1.msra.mxu0 0.0
    %598 = vmatprep.subr.mxu0 0.0
    %599 = vmatpush1.msra.mxu0 0.0
    %600 = vmatprep.subr.mxu0 0.0
    %601 = vmatpush1.msra.mxu0 0.0
    %602 = vmatprep.subr.mxu0 0.0
    %603 = vmatpush1.msra.mxu0 0.0
    %604 = vmatprep.subr.mxu0 0.0
    %605 = vmatpush1.msra.mxu0 0.0
    %606 = vmatprep.subr.mxu0 0.0
    %607 = vmatpush1.msra.mxu0 0.0
    %608 = vmatprep.subr.mxu0 0.0
    %609 = vmatpush1.msra.mxu0 0.0
    %610 = vmatprep.subr.mxu0 0.0
    %611 = vmatpush1.msra.mxu0 0.0
    %612 = vmatprep.subr.mxu0 0.0
    %613 = vmatpush1.msra.mxu0 %v72
    %614 = vmatprep.subr.mxu0 0.0
    %615 = vmatpush1.msra.mxu0 %v71
    %616 = vmatprep.subr.mxu0 0.0
    %617 = vmatpush2.msra.mxu0 0.0
    %618 = vmatprep.subr.mxu0 0.0
    %619 = vmatpush2.msra.mxu0 0.0
    %620 = vmatprep.subr.mxu0 0.0
    %621 = vmatpush2.msra.mxu0 0.0
    %622 = vmatprep.subr.mxu0 0.0
    %623 = vmatpush2.msra.mxu0 0.0
    %624 = vmatprep.subr.mxu0 0.0
    %625 = vmatpush2.msra.mxu0 0.0
    %626 = vmatprep.subr.mxu0 0.0
    %627 = vmatpush2.msra.mxu0 0.0
    %628 = vmatprep.subr.mxu0 0.0
    %629 = vmatpush2.msra.mxu0 0.0
    %630 = vmatprep.subr.mxu0 0.0
    %631 = vmatpush2.msra.mxu0 0.0
    %632 = vmatprep.subr.mxu0 0.0
    %633 = vmatpush2.msra.mxu0 0.0
    %634 = vmatprep.subr.mxu0 0.0
    %635 = vmatpush2.msra.mxu0 0.0
    %636 = vmatprep.subr.mxu0 0.0
    %637 = vmatpush2.msra.mxu0 0.0
    %638 = vmatprep.subr.mxu0 0.0
    %639 = vmatpush2.msra.mxu0 0.0
    %640 = vmatprep.subr.mxu0 0.0
    %641 = vmatpush2.msra.mxu0 0.0
    %642 = vmatprep.subr.mxu0 0.0
    %643 = vmatpush2.msra.mxu0 0.0
    %644 = vmatprep.subr.mxu0 0.0
    %645 = vmatpush2.msra.mxu0 0.0
    %646 = vmatprep.subr.mxu0 0.0
    %647 = vmatpush2.msra.mxu0 0.0
    %648 = vmatprep.mubr.f32.mxu0 0.0
    %649 = vmatmul.mubr.f32.gmra.mxu0 %v579
    %v650 = vpop.f32.mrf.mxu0
    %v651 = vadd.f32 0.0, %v650
    %v652 = vpop.f32.mrf.mxu0
    %653 = vmatprep.mubr.f32.mxu0 0.0
    %654 = vmatmul.mubr.f32.gmra.mxu0 %v582
    %v655 = vpop.f32.mrf.mxu0
    %v656 = vadd.f32 0.0, %v655
    %v657 = vpop.f32.mrf.mxu0
    %658 = vdwg.mxu0
    %v660 = vsel %vm91, %v89, 0
    %v663 = vsel %vm91, %v90, 0
    %665 = vmatprep.subr.mxu0 0.0
    %666 = vmatpush1.msra.mxu0 0.0
    %667 = vmatprep.subr.mxu0 0.0
    %668 = vmatpush1.msra.mxu0 0.0
    %669 = vmatprep.subr.mxu0 0.0
    %670 = vmatpush1.msra.mxu0 0.0
    %671 = vmatprep.subr.mxu0 0.0
    %672 = vmatpush1.msra.mxu0 0.0
    %673 = vmatprep.subr.mxu0 0.0
    %674 = vmatpush1.msra.mxu0 0.0
    %675 = vmatprep.subr.mxu0 0.0
    %676 = vmatpush1.msra.mxu0 0.0
    %677 = vmatprep.subr.mxu0 0.0
    %678 = vmatpush1.msra.mxu0 0.0
    %679 = vmatprep.subr.mxu0 0.0
    %680 = vmatpush1.msra.mxu0 0.0
    %681 = vmatprep.subr.mxu0 0.0
    %682 = vmatpush1.msra.mxu0 0.0
    %683 = vmatprep.subr.mxu0 0.0
    %684 = vmatpush1.msra.mxu0 0.0
    %685 = vmatprep.subr.mxu0 0.0
    %686 = vmatpush1.msra.mxu0 0.0
    %687 = vmatprep.subr.mxu0 0.0
    %688 = vmatpush1.msra.mxu0 0.0
    %689 = vmatprep.subr.mxu0 0.0
    %690 = vmatpush1.msra.mxu0 0.0
    %691 = vmatprep.subr.mxu0 0.0
    %692 = vmatpush1.msra.mxu0 0.0
    %693 = vmatprep.subr.mxu0 0.0
    %694 = vmatpush1.msra.mxu0 %v74
    %695 = vmatprep.subr.mxu0 0.0
    %696 = vmatpush1.msra.mxu0 %v73
    %697 = vmatprep.subr.mxu0 0.0
    %698 = vmatpush2.msra.mxu0 0.0
    %699 = vmatprep.subr.mxu0 0.0
    %700 = vmatpush2.msra.mxu0 0.0
    %701 = vmatprep.subr.mxu0 0.0
    %702 = vmatpush2.msra.mxu0 0.0
    %703 = vmatprep.subr.mxu0 0.0
    %704 = vmatpush2.msra.mxu0 0.0
    %705 = vmatprep.subr.mxu0 0.0
    %706 = vmatpush2.msra.mxu0 0.0
    %707 = vmatprep.subr.mxu0 0.0
    %708 = vmatpush2.msra.mxu0 0.0
    %709 = vmatprep.subr.mxu0 0.0
    %710 = vmatpush2.msra.mxu0 0.0
    %711 = vmatprep.subr.mxu0 0.0
    %712 = vmatpush2.msra.mxu0 0.0
    %713 = vmatprep.subr.mxu0 0.0
    %714 = vmatpush2.msra.mxu0 0.0
    %715 = vmatprep.subr.mxu0 0.0
    %716 = vmatpush2.msra.mxu0 0.0
    %717 = vmatprep.subr.mxu0 0.0
    %718 = vmatpush2.msra.mxu0 0.0
    %719 = vmatprep.subr.mxu0 0.0
    %720 = vmatpush2.msra.mxu0 0.0
    %721 = vmatprep.subr.mxu0 0.0
    %722 = vmatpush2.msra.mxu0 0.0
    %723 = vmatprep.subr.mxu0 0.0
    %724 = vmatpush2.msra.mxu0 0.0
    %725 = vmatprep.subr.mxu0 0.0
    %726 = vmatpush2.msra.mxu0 0.0
    %727 = vmatprep.subr.mxu0 0.0
    %728 = vmatpush2.msra.mxu0 0.0
    %729 = vmatprep.mubr.f32.mxu0 0.0
    %730 = vmatmul.mubr.f32.gmra.mxu0 %v660
    %v731 = vpop.f32.mrf.mxu0
    %v732 = vadd.f32 0.0, %v731
    %v733 = vpop.f32.mrf.mxu0
    %734 = vmatprep.mubr.f32.mxu0 0.0
    %735 = vmatmul.mubr.f32.gmra.mxu0 %v663
    %v736 = vpop.f32.mrf.mxu0
    %v737 = vadd.f32 0.0, %v736
    %v738 = vpop.f32.mrf.mxu0
    %739 = vdwg.mxu0
    %756 = vrot.lane.b32.xlu0 %v59, 16
    %v757 = vpop.permute.xlu0 %756
    %758 = vrot.lane.b32.xlu0 %v60, 16
    %v759 = vpop.permute.xlu0 %758
    %760 = vrot.lane.b32.xlu0 %v61, 16
    %v761 = vpop.permute.xlu0 %760
    %762 = vrot.lane.b32.xlu0 %v62, 16
    %v763 = vpop.permute.xlu0 %762
    %764 = vrot.lane.b32.xlu0 %v63, 16
    %v765 = vpop.permute.xlu0 %764
    %766 = vrot.lane.b32.xlu0 %v64, 16
    %v767 = vpop.permute.xlu0 %766
    %768 = vrot.lane.b32.xlu0 %v65, 16
    %v769 = vpop.permute.xlu0 %768
    %770 = vrot.lane.b32.xlu0 %v66, 16
    %v771 = vpop.permute.xlu0 %770
    %772 = vrot.lane.b32.xlu0 %v67, 16
    %v773 = vpop.permute.xlu0 %772
    %774 = vrot.lane.b32.xlu0 %v68, 16
    %v775 = vpop.permute.xlu0 %774
    %776 = vrot.lane.b32.xlu0 %v69, 16
    %v777 = vpop.permute.xlu0 %776
    %778 = vrot.lane.b32.xlu0 %v70, 16
    %v779 = vpop.permute.xlu0 %778
    %780 = vrot.lane.b32.xlu0 %v71, 16
    %v781 = vpop.permute.xlu0 %780
    %782 = vrot.lane.b32.xlu0 %v72, 16
    %v783 = vpop.permute.xlu0 %782
    %784 = vrot.lane.b32.xlu0 %v73, 16
    %v785 = vpop.permute.xlu0 %784
    %786 = vrot.lane.b32.xlu0 %v74, 16
    %v787 = vpop.permute.xlu0 %786
    %v804 = vsel %vm91, %v165, %v757
    %v805 = vsel %vm91, %v170, %v759
    %v806 = vsel %vm91, %v246, %v761
    %v807 = vsel %vm91, %v251, %v763
    %v808 = vsel %vm91, %v327, %v765
    %v809 = vsel %vm91, %v332, %v767
    %v810 = vsel %vm91, %v408, %v769
    %v811 = vsel %vm91, %v413, %v771
    %v812 = vsel %vm91, %v489, %v773
    %v813 = vsel %vm91, %v494, %v775
    %v814 = vsel %vm91, %v570, %v777
    %v815 = vsel %vm91, %v575, %v779
    %v816 = vsel %vm91, %v651, %v781
    %v817 = vsel %vm91, %v656, %v783
    %v818 = vsel %vm91, %v732, %v785
    %v819 = vsel %vm91, %v737, %v787
    %v820 = vld [vmem:[#allocation7] sm:$0xff]
    %v821 = vld [vmem:[#allocation7 + $0x8] sm:$0xff]
    %v822 = vld [vmem:[#allocation7 + $0x10] sm:$0xff]
    %v823 = vld [vmem:[#allocation7 + $0x18] sm:$0xff]
    %vm824 = vcmask 261120
    %v826 = vsel %vm824, %v804, 0
    %v829 = vsel %vm824, %v805, 0
    %v832 = vsel %vm824, %v806, 0
    %v835 = vsel %vm824, %v807, 0
    %v838 = vsel %vm824, %v808, 0
    %v841 = vsel %vm824, %v809, 0
    %v844 = vsel %vm824, %v810, 0
    %v847 = vsel %vm824, %v811, 0
    %v850 = vsel %vm824, %v812, 0
    %v853 = vsel %vm824, %v813, 0
    %v856 = vsel %vm824, %v814, 0
    %v859 = vsel %vm824, %v815, 0
    %v862 = vsel %vm824, %v816, 0
    %v865 = vsel %vm824, %v817, 0
    %v868 = vsel %vm824, %v818, 0
    %v871 = vsel %vm824, %v819, 0
    %873 = vmatprep.subr.mxu0 0.0
    %874 = vmatpush1.msra.mxu0 0.0
    %875 = vmatprep.subr.mxu0 0.0
    %876 = vmatpush1.msra.mxu0 0.0
    %877 = vmatprep.subr.mxu0 0.0
    %878 = vmatpush1.msra.mxu0 0.0
    %879 = vmatprep.subr.mxu0 0.0
    %880 = vmatpush1.msra.mxu0 0.0
    %881 = vmatprep.subr.mxu0 0.0
    %882 = vmatpush1.msra.mxu0 0.0
    %883 = vmatprep.subr.mxu0 0.0
    %884 = vmatpush1.msra.mxu0 0.0
    %885 = vmatprep.subr.mxu0 0.0
    %886 = vmatpush1.msra.mxu0 0.0
    %887 = vmatprep.subr.mxu0 0.0
    %888 = vmatpush1.msra.mxu0 0.0
    %889 = vmatprep.subr.mxu0 0.0
    %890 = vmatpush1.msra.mxu0 0.0
    %891 = vmatprep.subr.mxu0 0.0
    %892 = vmatpush1.msra.mxu0 0.0
    %893 = vmatprep.subr.mxu0 0.0
    %894 = vmatpush1.msra.mxu0 0.0
    %895 = vmatprep.subr.mxu0 0.0
    %896 = vmatpush1.msra.mxu0 0.0
    %897 = vmatprep.subr.mxu0 0.0
    %898 = vmatpush1.msra.mxu0 %v823
    %899 = vmatprep.subr.mxu0 0.0
    %900 = vmatpush1.msra.mxu0 %v822
    %901 = vmatprep.subr.mxu0 0.0
    %902 = vmatpush1.msra.mxu0 %v821
    %903 = vmatprep.subr.mxu0 0.0
    %904 = vmatpush1.msra.mxu0 %v820
    %905 = vmatprep.subr.mxu0 0.0
    %906 = vmatpush2.msra.mxu0 0.0
    %907 = vmatprep.subr.mxu0 0.0
    %908 = vmatpush2.msra.mxu0 0.0
    %909 = vmatprep.subr.mxu0 0.0
    %910 = vmatpush2.msra.mxu0 0.0
    %911 = vmatprep.subr.mxu0 0.0
    %912 = vmatpush2.msra.mxu0 0.0
    %913 = vmatprep.subr.mxu0 0.0
    %914 = vmatpush2.msra.mxu0 0.0
    %915 = vmatprep.subr.mxu0 0.0
    %916 = vmatpush2.msra.mxu0 0.0
    %917 = vmatprep.subr.mxu0 0.0
    %918 = vmatpush2.msra.mxu0 0.0
    %919 = vmatprep.subr.mxu0 0.0
    %920 = vmatpush2.msra.mxu0 0.0
    %921 = vmatprep.subr.mxu0 0.0
    %922 = vmatpush2.msra.mxu0 0.0
    %923 = vmatprep.subr.mxu0 0.0
    %924 = vmatpush2.msra.mxu0 0.0
    %925 = vmatprep.subr.mxu0 0.0
    %926 = vmatpush2.msra.mxu0 0.0
    %927 = vmatprep.subr.mxu0 0.0
    %928 = vmatpush2.msra.mxu0 0.0
    %929 = vmatprep.subr.mxu0 0.0
    %930 = vmatpush2.msra.mxu0 0.0
    %931 = vmatprep.subr.mxu0 0.0
    %932 = vmatpush2.msra.mxu0 0.0
    %933 = vmatprep.subr.mxu0 0.0
    %934 = vmatpush2.msra.mxu0 0.0
    %935 = vmatprep.subr.mxu0 0.0
    %936 = vmatpush2.msra.mxu0 0.0
    %937 = vmatprep.mubr.f32.mxu0 0.0
    %938 = vmatmul.mubr.f32.gmra.mxu0 %v826
    %v939 = vpop.f32.mrf.mxu0
    %v940 = vadd.f32 0.0, %v939
    %v941 = vpop.f32.mrf.mxu0
    %942 = vmatprep.mubr.f32.mxu0 0.0
    %943 = vmatmul.mubr.f32.gmra.mxu0 %v829
    %v944 = vpop.f32.mrf.mxu0
    %v945 = vadd.f32 0.0, %v944
    %v946 = vpop.f32.mrf.mxu0
    %947 = vmatprep.mubr.f32.mxu0 0.0
    %948 = vmatmul.mubr.f32.gmra.mxu0 %v832
    %v949 = vpop.f32.mrf.mxu0
    %v950 = vadd.f32 0.0, %v949
    %v951 = vpop.f32.mrf.mxu0
    %952 = vmatprep.mubr.f32.mxu0 0.0
    %953 = vmatmul.mubr.f32.gmra.mxu0 %v835
    %v954 = vpop.f32.mrf.mxu0
    %v955 = vadd.f32 0.0, %v954
    %v956 = vpop.f32.mrf.mxu0
    %957 = vmatprep.mubr.f32.mxu0 0.0
    %958 = vmatmul.mubr.f32.gmra.mxu0 %v838
    %v959 = vpop.f32.mrf.mxu0
    %v960 = vadd.f32 0.0, %v959
    %v961 = vpop.f32.mrf.mxu0
    %962 = vmatprep.mubr.f32.mxu0 0.0
    %963 = vmatmul.mubr.f32.gmra.mxu0 %v841
    %v964 = vpop.f32.mrf.mxu0
    %v965 = vadd.f32 0.0, %v964
    %v966 = vpop.f32.mrf.mxu0
    %967 = vmatprep.mubr.f32.mxu0 0.0
    %968 = vmatmul.mubr.f32.gmra.mxu0 %v844
    %v969 = vpop.f32.mrf.mxu0
    %v970 = vadd.f32 0.0, %v969
    %v971 = vpop.f32.mrf.mxu0
    %972 = vmatprep.mubr.f32.mxu0 0.0
    %973 = vmatmul.mubr.f32.gmra.mxu0 %v847
    %v974 = vpop.f32.mrf.mxu0
    %v975 = vadd.f32 0.0, %v974
    %v976 = vpop.f32.mrf.mxu0
    %977 = vmatprep.mubr.f32.mxu0 0.0
    %978 = vmatmul.mubr.f32.gmra.mxu0 %v850
    %v979 = vpop.f32.mrf.mxu0
    %v980 = vadd.f32 0.0, %v979
    %v981 = vpop.f32.mrf.mxu0
    %982 = vmatprep.mubr.f32.mxu0 0.0
    %983 = vmatmul.mubr.f32.gmra.mxu0 %v853
    %v984 = vpop.f32.mrf.mxu0
    %v985 = vadd.f32 0.0, %v984
    %v986 = vpop.f32.mrf.mxu0
    %987 = vmatprep.mubr.f32.mxu0 0.0
    %988 = vmatmul.mubr.f32.gmra.mxu0 %v856
    %v989 = vpop.f32.mrf.mxu0
    %v990 = vadd.f32 0.0, %v989
    %v991 = vpop.f32.mrf.mxu0
    %992 = vmatprep.mubr.f32.mxu0 0.0
    %993 = vmatmul.mubr.f32.gmra.mxu0 %v859
    %v994 = vpop.f32.mrf.mxu0
    %v995 = vadd.f32 0.0, %v994
    %v996 = vpop.f32.mrf.mxu0
    %997 = vmatprep.mubr.f32.mxu0 0.0
    %998 = vmatmul.mubr.f32.gmra.mxu0 %v862
    %v999 = vpop.f32.mrf.mxu0
    %v1000 = vadd.f32 0.0, %v999
    %v1001 = vpop.f32.mrf.mxu0
    %1002 = vmatprep.mubr.f32.mxu0 0.0
    %1003 = vmatmul.mubr.f32.gmra.mxu0 %v865
    %v1004 = vpop.f32.mrf.mxu0
    %v1005 = vadd.f32 0.0, %v1004
    %v1006 = vpop.f32.mrf.mxu0
    %1007 = vmatprep.mubr.f32.mxu0 0.0
    %1008 = vmatmul.mubr.f32.gmra.mxu0 %v868
    %v1009 = vpop.f32.mrf.mxu0
    %v1010 = vadd.f32 0.0, %v1009
    %v1011 = vpop.f32.mrf.mxu0
    %1012 = vmatprep.mubr.f32.mxu0 0.0
    %1013 = vmatmul.mubr.f32.gmra.mxu0 %v871
    %v1014 = vpop.f32.mrf.mxu0
    %v1015 = vadd.f32 0.0, %v1014
    %v1016 = vpop.f32.mrf.mxu0
    %1017 = vdwg.mxu0
    %1020 = vrot.lane.b32.xlu0 %v950, 32
    %v1021 = vpop.permute.xlu0 %1020
    %1022 = vrot.lane.b32.xlu0 %v955, 32
    %v1023 = vpop.permute.xlu0 %1022
    %1028 = vrot.lane.b32.xlu0 %v960, 64
    %v1029 = vpop.permute.xlu0 %1028
    %1030 = vrot.lane.b32.xlu0 %v965, 64
    %v1031 = vpop.permute.xlu0 %1030
    %1036 = vrot.lane.b32.xlu0 %v970, 96
    %v1037 = vpop.permute.xlu0 %1036
    %1038 = vrot.lane.b32.xlu0 %v975, 96
    %v1039 = vpop.permute.xlu0 %1038
    %1044 = vrot.lane.b32.xlu0 %v990, 32
    %v1045 = vpop.permute.xlu0 %1044
    %1046 = vrot.lane.b32.xlu0 %v995, 32
    %v1047 = vpop.permute.xlu0 %1046
    %1052 = vrot.lane.b32.xlu0 %v1000, 64
    %v1053 = vpop.permute.xlu0 %1052
    %1054 = vrot.lane.b32.xlu0 %v1005, 64
    %v1055 = vpop.permute.xlu0 %1054
    %1060 = vrot.lane.b32.xlu0 %v1010, 96
    %v1061 = vpop.permute.xlu0 %1060
    %1062 = vrot.lane.b32.xlu0 %v1015, 96
    %v1063 = vpop.permute.xlu0 %1062
    %v1066 = vsel %vm824, %v940, %v1021
    %v1067 = vsel %vm824, %v945, %v1023
    %vm1068 = vcmask 523264
    %v1069 = vsel %vm1068, %v1066, %v1029
    %v1070 = vsel %vm1068, %v1067, %v1031
    %vm1071 = vcmask 785408
    %v1072 = vsel %vm1071, %v1069, %v1037
    %v1073 = vsel %vm1071, %v1070, %v1039
    %v1074 = vsel %vm824, %v980, %v1045
    %v1075 = vsel %vm824, %v985, %v1047
    %v1076 = vsel %vm1068, %v1074, %v1053
    %v1077 = vsel %vm1068, %v1075, %v1055
    %v1078 = vsel %vm1071, %v1076, %v1061
    %v1079 = vsel %vm1071, %v1077, %v1063
    %v1080 = vadd.f32 %v1072, %v1073
    %v1081 = vrot.slane %v1080, 4
    %v1082 = vadd.f32 %v1080, %v1081
    %v1083 = vrot.slane %v1082, 2
    %v1084 = vadd.f32 %v1082, %v1083
    %v1085 = vrot.slane %v1084, 1
    %v1086 = vadd.f32 %v1084, %v1085
    %v1087 = vadd.f32 %v1078, %v1079
    %v1088 = vrot.slane %v1087, 4
    %v1089 = vadd.f32 %v1087, %v1088
    %v1090 = vrot.slane %v1089, 2
    %v1091 = vadd.f32 %v1089, %v1090
    %v1092 = vrot.slane %v1091, 1
    %v1093 = vadd.f32 %v1091, %v1092
    %v1094 = vrcp.pop 16.0
    %v1095 = vmul.f32 %v1086, %v1094
    %v1096 = vmul.f32 %v1093, %v1094
    %v1097 = vsub.f32 %v1072, %v1095
    %v1098 = vsub.f32 %v1078, %v1096
    %v1099 = vsub.f32 %v1073, %v1095
    %v1100 = vsub.f32 %v1079, %v1096
    %v1101 = vmul.f32 %v1097, %v1097
    %v1102 = vmul.f32 %v1098, %v1098
    %v1103 = vmul.f32 %v1099, %v1099
    %v1104 = vmul.f32 %v1100, %v1100
    %v1105 = vadd.f32 %v1101, %v1103
    %v1106 = vrot.slane %v1105, 4
    %v1107 = vadd.f32 %v1105, %v1106
    %v1108 = vrot.slane %v1107, 2
    %v1109 = vadd.f32 %v1107, %v1108
    %v1110 = vrot.slane %v1109, 1
    %v1111 = vadd.f32 %v1109, %v1110
    %v1112 = vadd.f32 %v1102, %v1104
    %v1113 = vrot.slane %v1112, 4
    %v1114 = vadd.f32 %v1112, %v1113
    %v1115 = vrot.slane %v1114, 2
    %v1116 = vadd.f32 %v1114, %v1115
    %v1117 = vrot.slane %v1116, 1
    %v1118 = vadd.f32 %v1116, %v1117
    %v1119 = vmul.f32 %v1111, %v1094
    %v1120 = vmul.f32 %v1118, %v1094
    %v1121 = vld [vmem:[%s3] ss:$2 sm:$0x3]
    %v1122 = vadd.f32 %v1119, 1e-05
    %v1123 = vadd.f32 %v1120, 1e-05
    %v1124 = vrsqrt.pop %v1122
    %v1125 = vrsqrt.pop %v1123
    %v1128 = vcombine.low %v1124, %v1125
    %v1130 = vunpack.c.l.s4 1966171168
    %v1131 = vunpack.c.0.s8 %v1130
    %v1132 = vlaneseq
    %v1133 = vshrl.u32 %v1132, 7
    %v1134 = vsub.s32 %v1131, %v1133
    %v1135 = vrot.slane %v1128, %v1134
    %v1137 = vunpack.c.l.s4 1966171168
    %v1138 = vunpack.c.0.s8 %v1137
    %v1139 = vlaneseq
    %v1140 = vshrl.u32 %v1139, 7
    %v1141 = vsub.s32 %v1138, %v1140
    %v1142 = vrot.slane %v1135, %v1141
    %v1144 = vmul.f32 %v1121, %v1142
    %v1146 = vlaneseq
    %v1147 = vshrl.u32 %v1146, 7
    %v1148 = vsub.s32 0, %v1147
    %v1149 = vrot.slane %v1144, %v1148
    %v1150 = vlaneseq
    %v1151 = vshrl.u32 %v1150, 7
    %v1152 = vsub.s32 1, %v1151
    %v1153 = vrot.slane %v1144, %v1152
    %v1156 = vmul.f32 %v1097, %v1149
    %v1157 = vmul.f32 %v1098, %v1153
    %v1158 = vmul.f32 %v1099, %v1149
    %v1159 = vmul.f32 %v1100, %v1153
    %s1160 = scalar_lea.vmem %s3, 1
    %v1161 = vld [vmem:[%s1160] ss:$2 sm:$0x3]
    %v1163 = vlaneseq
    %v1164 = vshrl.u32 %v1163, 7
    %v1165 = vsub.s32 0, %v1164
    %v1166 = vrot.slane %v1161, %v1165
    %v1167 = vlaneseq
    %v1168 = vshrl.u32 %v1167, 7
    %v1169 = vsub.s32 1, %v1168
    %v1170 = vrot.slane %v1161, %v1169
    %v1173 = vadd.f32 %v1156, %v1166
    %v1174 = vadd.f32 %v1157, %v1170
    %v1175 = vadd.f32 %v1158, %v1166
    %v1176 = vadd.f32 %v1159, %v1170
    %v1177 = vmax.f32 %v1173, 0.0
    %v1178 = vmax.f32 %v1174, 0.0
    %v1179 = vmax.f32 %v1175, 0.0
    %v1180 = vmax.f32 %v1176, 0.0
    %1181 = vst [vmem:[#allocation8] sm:$0xff] %v1177
    %1182 = vst [vmem:[#allocation8 + $0x8] sm:$0xff] %v1178
    %1183 = vst [vmem:[#allocation8 + $0x10] sm:$0xff] %v1179
    %1184 = vst [vmem:[#allocation8 + $0x18] sm:$0xff] %v1180
    // Predicated region
    $region30: #{tpu_custom_call.1} parent=1 // pred_check
      _
    $region31: #{tpu_custom_call.1} parent=1 // pred_check_branch
      %1186 = sbr.rel (0) target = $region33
    $region32: #{tpu_custom_call.1} parent=1 // pred_region
      %s1188 = ssub.s32 512, 512
      %1189 = vsyncadd [#allocation4], %s1188
      %s1190 = sshll.u32 [#allocation8], 4
      %s1191 = int_to_ptr.vmem [resolvable:$true] %s1190
      %1196 = dma.vmem_to_hbm [thread:$0]  %s1191, 512, %s4, [#allocation4], 256, 256, 16
    $region33: #{tpu_custom_call.1} parent=1 // pred_fallthru
      _
    // Predicated region
    $region34: #{tpu_custom_call.1} parent=1 // pred_check
      _
    $region35: #{tpu_custom_call.1} parent=1 // pred_check_branch
      %1198 = sbr.rel (0) target = $region37
    $region36: #{tpu_custom_call.1} parent=1 // pred_region
      %1199 = dma.done [#allocation4], 512
    $region37: #{tpu_custom_call.1} parent=1 // pred_fallthru
      _
    %1200 = vsyncpa [#allocation3], 1
    %1201 = vsyncpa [#allocation6], 1
    %1202 = vsyncpa [#allocation4], 1

</llo_original>
